<compile_context>
chip_gen: v5e
topology: v5e:2x2
jax: 0.10.0
libtpu: 0.0.40
codegen_flags: <defaults>
</compile_context>

<pallas_src>
import functools
import math

import jax
import jax.numpy as jnp
from jax.experimental import pallas as pl
from jax.experimental.pallas import tpu as pltpu

# ---- module constants (PyTorch defaults) -----------------------------------
G_NA = 120.0
G_K = 36.0
G_L = 0.3
E_NA = 50.0
E_K = -77.0
E_L = -54.4

M_INIT = 0.05
H_INIT = 0.6
N_INIT = 0.32

_LANES = 128
_SUBLANES = 8
_MAX_BLOCK_ROWS = 2048  # 2048 x 128 x 4B = 1 MiB per array per block


def _round_up(x, m):
    return ((x + m - 1) // m) * m


def _slab_geometry(step_size):
    """Return (rows, block_rows) for a per-timestep element count."""
    raw_rows = -(-step_size // _LANES)
    if raw_rows <= _SUBLANES:
        block_rows = _SUBLANES
    else:
        # >= 2 row blocks whenever possible so v7x megacore can shard the row
        # axis; never exceed 1 MiB/array/block.
        half = (raw_rows + 1) // 2
        block_rows = min(_MAX_BLOCK_ROWS, _round_up(half, _SUBLANES))
    rows = _round_up(raw_rows, block_rows)
    return rows, block_rows


def _hh_fused_kernel(dt_ref, v_ref, m0_ref, h0_ref, n0_ref,
                     i_ref, m_ref, h_ref, n_ref):
    """T-fused elementwise HH update on one (block_rows, 128) row block."""
    t = pl.program_id(1)

    # Load carried state into the VMEM-resident output block at the first
    # timestep of this row block; it lives in VMEM across the whole T axis and
    # is flushed to HBM only when the row block changes.
    @pl.when(t == 0)
    def _():
        m_ref[...] = m0_ref[...]
        h_ref[...] = h0_ref[...]
        n_ref[...] = n0_ref[...]

    dt = dt_ref[0, 0]
    V = v_ref[...]
    m = m_ref[...]
    h = h_ref[...]
    n = n_ref[...]

    v40 = V + 40.0
    v55 = V + 55.0
    v65 = V + 65.0  # shared by beta_m / alpha_h / beta_n

    # Gating rate functions.  exp/tanh go to the EUP slot; constant divides
    # replaced by constant multiplies; data-dependent divides kept exact.
    alpha_m = 0.1 * v40 / (1.0 - jnp.exp(v40 * -0.1))
    beta_m = 4.0 * jnp.exp(v65 * (-1.0 / 18.0))
    alpha_h = 0.07 * jnp.exp(v65 * -0.05)
    # logistic(x) == 0.5 * (1 + tanh(x / 2)) exactly; saves one f32 divide.
    beta_h = 0.5 * (1.0 + jnp.tanh((V + 35.0) * 0.05))
    alpha_n = 0.01 * v55 / (1.0 - jnp.exp(v55 * -0.1))
    beta_n = 0.125 * jnp.exp(v65 * (-1.0 / 80.0))

    m_new = m + dt * (alpha_m * (1.0 - m) - beta_m * m)
    h_new = h + dt * (alpha_h * (1.0 - h) - beta_h * h)
    n_new = n + dt * (alpha_n * (1.0 - n) - beta_n * n)

    m2 = m_new * m_new
    n2 = n_new * n_new
    i_na = G_NA * (m2 * m_new) * h_new * (V - E_NA)
    i_k = G_K * (n2 * n2) * (V - E_K)
    i_l = G_L * (V - E_L)

    i_ref[...] = i_na + i_k + i_l
    m_ref[...] = m_new
    h_ref[...] = h_new
    n_ref[...] = n_new


@functools.partial(jax.jit, static_argnums=(5,), donate_argnums=(1, 2, 3))
def _ionic_currents_slab(v_slab, m, h, n, dt, block_rows):
    """Fused T-step HH update on slab-layout buffers.

    v_slab: (T, rows, 128) f32.  m/h/n: (rows, 128) f32 (donated, updated in
    place via input_output_aliases).  dt: f32 scalar (traced, no recompile).
    Returns (i_slab, m_new, h_new, n_new).
    """
    T, rows, _ = v_slab.shape
    row_blocks = rows // block_rows
    dt_arr = jnp.asarray(dt, jnp.float32).reshape(1, 1)

    v_spec = pl.BlockSpec((None, block_rows, _LANES), lambda r, t: (t, r, 0))
    i_spec = pl.BlockSpec((None, block_rows, _LANES), lambda r, t: (t, r, 0))
    st_spec = pl.BlockSpec((block_rows, _LANES), lambda r, t: (r, 0))
    dt_spec = pl.BlockSpec(memory_space=pltpu.MemorySpace.SMEM)

    slab_sds = jax.ShapeDtypeStruct((rows, _LANES), jnp.float32)
    out_shapes = (jax.ShapeDtypeStruct((T, rows, _LANES), jnp.float32),
                  slab_sds, slab_sds, slab_sds)

    return pl.pallas_call(
        _hh_fused_kernel,
        out_shape=out_shapes,
        grid=(row_blocks, T),
        in_specs=[dt_spec, v_spec, st_spec, st_spec, st_spec],
        out_specs=(i_spec, st_spec, st_spec, st_spec),
        input_output_aliases={2: 1, 3: 2, 4: 3},  # m, h, n updated in place
        compiler_params=pltpu.CompilerParams(
            dimension_semantics=("parallel", "arbitrary"),
            vmem_limit_bytes=32 * 1024 * 1024,
        ),
    )(dt_arr, v_slab, m, h, n)


class IonicCurrentsPallas:
    """Stateful wrapper mirroring the PyTorch module's forward semantics.

    State (m/h/n) is kept persistently in padded slab layout (rows, 128) so the
    Pallas in-place alias survives non-tile-aligned input shapes; only V and I
    are reshaped at the call boundary.
    """

    def __init__(self):
        self.reset_states()

    def reset_states(self):
        self.m = None
        self.h = None
        self.n = None
        self._step_shape = None
        self._size = None
        self._rows = None
        self._block_rows = None
        self._pad = None

    def _ensure_state(self, step_shape):
        if self.m is not None and self._step_shape == step_shape:
            return
        size = math.prod(step_shape)
        rows, block_rows = _slab_geometry(size)
        self._step_shape = step_shape
        self._size = size
        self._rows = rows
        self._block_rows = block_rows
        self._pad = rows * _LANES - size
        self.m = jnp.full((rows, _LANES), M_INIT, jnp.float32)
        self.h = jnp.full((rows, _LANES), H_INIT, jnp.float32)
        self.n = jnp.full((rows, _LANES), N_INIT, jnp.float32)

    def step_sequence(self, V_seq, dt):
        """Run T fused timesteps.  V_seq: (T, *shape).  Returns I: (T, *shape)."""
        V_seq = jnp.asarray(V_seq, jnp.float32)
        T = V_seq.shape[0]
        step_shape = tuple(V_seq.shape[1:])
        self._ensure_state(step_shape)

        v_flat = V_seq.reshape(T, self._size)
        if self._pad:
            v_flat = jnp.pad(v_flat, ((0, 0), (0, self._pad)))
        v_slab = v_flat.reshape(T, self._rows, _LANES)

        i_slab, self.m, self.h, self.n = _ionic_currents_slab(
            v_slab, self.m, self.h, self.n, jnp.float32(dt), self._block_rows)

        i_flat = i_slab.reshape(T, self._rows * _LANES)
        if self._pad:
            i_flat = i_flat[:, :self._size]
        return i_flat.reshape((T,) + step_shape)

    def __call__(self, V, dt):
        """Single forward step (matches the PyTorch module's forward)."""
        return self.step_sequence(jnp.asarray(V, jnp.float32)[None], dt)[0]

    def get_state(self):
        """Return (m, h, n) reshaped to the per-step input shape."""
        def unpack(x):
            flat = x.reshape(-1)
            if self._pad:
                flat = flat[:self._size]
            return flat.reshape(self._step_shape)
        return unpack(self.m), unpack(self.h), unpack(self.n)


def _reference_step(V, m, h, n, dt):
    """Pure-JAX reference (mirrors the PyTorch forward exactly)."""
    alpha_m = 0.1 * (V + 40.0) / (1.0 - jnp.exp(-(V + 40.0) / 10.0))
    beta_m = 4.0 * jnp.exp(-(V + 65.0) / 18.0)
    alpha_h = 0.07 * jnp.exp(-(V + 65.0) / 20.0)
    beta_h = 1.0 / (1.0 + jnp.exp(-(V + 35.0) / 10.0))
    alpha_n = 0.01 * (V + 55.0) / (1.0 - jnp.exp(-(V + 55.0) / 10.0))
    beta_n = 0.125 * jnp.exp(-(V + 65.0) / 80.0)
    m_new = m + dt * (alpha_m * (1.0 - m) - beta_m * m)
    h_new = h + dt * (alpha_h * (1.0 - h) - beta_h * h)
    n_new = n + dt * (alpha_n * (1.0 - n) - beta_n * n)
    i_na = G_NA * m_new ** 3 * h_new * (V - E_NA)
    i_k = G_K * n_new ** 4 * (V - E_K)
    i_l = G_L * (V - E_L)
    return i_na + i_k + i_l, m_new, h_new, n_new


if __name__ == "__main__":
    key = jax.random.PRNGKey(0)
    k1, k2 = jax.random.split(key)
    V = -65.0 + 10.0 * jax.random.normal(k1, (2, 4, 16, 16), dtype=jnp.float32)
    dt = 0.01

    # --- single-step path (T=1) ---------------------------------------------
    module = IonicCurrentsPallas()
    I1 = module(V, dt)
    jax.block_until_ready(I1)

    m0 = jnp.full_like(V, M_INIT)
    h0 = jnp.full_like(V, H_INIT)
    n0 = jnp.full_like(V, N_INIT)
    I_ref1, m_r1, h_r1, n_r1 = _reference_step(V, m0, h0, n0, dt)
    m1, h1, n1 = module.get_state()
    assert jnp.allclose(I1, I_ref1, rtol=1e-4, atol=1e-3)
    assert jnp.allclose(m1, m_r1, rtol=1e-4, atol=1e-5)
    assert jnp.allclose(h1, h_r1, rtol=1e-4, atol=1e-5)
    assert jnp.allclose(n1, n_r1, rtol=1e-4, atol=1e-5)

    # Second step exercises the in-place (aliased/donated) slab state carry.
    I2 = module(V, dt)
    jax.block_until_ready(I2)
    I_ref2, m_r2, h_r2, n_r2 = _reference_step(V, m_r1, h_r1, n_r1, dt)
    assert jnp.allclose(I2, I_ref2, rtol=1e-4, atol=1e-3)

    # --- fused multi-step path (T=8 in one pallas_call, state in VMEM) ------
    T = 8
    V_seq = -65.0 + 10.0 * jax.random.normal(
        k2, (T, 2, 4, 16, 16), dtype=jnp.float32)
    module2 = IonicCurrentsPallas()
    I_seq = module2.step_sequence(V_seq, dt)
    jax.block_until_ready(I_seq)

    m_r, h_r, n_r = m0, h0, n0
    for t in range(T):
        I_r, m_r, h_r, n_r = _reference_step(V_seq[t], m_r, h_r, n_r, dt)
        assert jnp.allclose(I_seq[t], I_r, rtol=1e-4, atol=1e-3)
    m2_, h2_, n2_ = module2.get_state()
    assert jnp.allclose(m2_, m_r, rtol=1e-4, atol=1e-5)
    assert jnp.allclose(h2_, h_r, rtol=1e-4, atol=1e-5)
    assert jnp.allclose(n2_, n_r, rtol=1e-4, atol=1e-5)

    print("KERNEL_OK")
</pallas_src>

<mosaic_0001>
module attributes {stable_mosaic.version = 11 : i64} {
  func.func @_hh_fused_kernel(%arg0: i32, %arg1: i32, %arg2: memref<1x1xf32, #tpu.memory_space<smem>>, %arg3: memref<1x8x128xf32, #tpu.memory_space<vmem>>, %arg4: memref<8x128xf32, #tpu.memory_space<vmem>>, %arg5: memref<8x128xf32, #tpu.memory_space<vmem>>, %arg6: memref<8x128xf32, #tpu.memory_space<vmem>>, %arg7: memref<1x8x128xf32, #tpu.memory_space<vmem>>, %arg8: memref<8x128xf32, #tpu.memory_space<vmem>>, %arg9: memref<8x128xf32, #tpu.memory_space<vmem>>, %arg10: memref<8x128xf32, #tpu.memory_space<vmem>>) attributes {dimension_semantics = [#tpu.dimension_semantics<parallel>, #tpu.dimension_semantics<arbitrary>], iteration_bounds = array<i64: 2, 1>, scalar_prefetch = 0 : i64, scratch_operands = 0 : i64, tpu.core_type = #tpu.core_type<tc>, window_params = [{transform_indices = @transform_0, window_bounds = array<i64: 1, 1>}, {transform_indices = @transform_1, window_bounds = array<i64: 1, 8, 128>}, {transform_indices = @transform_2, window_bounds = array<i64: 8, 128>}, {transform_indices = @transform_3, window_bounds = array<i64: 8, 128>}, {transform_indices = @transform_4, window_bounds = array<i64: 8, 128>}, {transform_indices = @transform_5, window_bounds = array<i64: 1, 8, 128>}, {transform_indices = @transform_6, window_bounds = array<i64: 8, 128>}, {transform_indices = @transform_7, window_bounds = array<i64: 8, 128>}, {transform_indices = @transform_8, window_bounds = array<i64: 8, 128>}]} {
    %c0_i32 = arith.constant 0 : i32
    %0 = arith.cmpi eq, %arg1, %c0_i32 : i32
    %1 = arith.extui %0 : i1 to i32
    %c0_i32_0 = arith.constant 0 : i32
    %2 = arith.cmpi ne, %1, %c0_i32_0 : i32
    scf.if %2 {
      %c0_47 = arith.constant 0 : index
      %c0_48 = arith.constant 0 : index
      %106 = vector.load %arg4[%c0_47, %c0_48] : memref<8x128xf32, #tpu.memory_space<vmem>>, vector<8x128xf32>
      %c0_49 = arith.constant 0 : index
      %c0_50 = arith.constant 0 : index
      %107 = vector.load %arg8[%c0_49, %c0_50] : memref<8x128xf32, #tpu.memory_space<vmem>>, vector<8x128xf32>
      tpu.vector_store %arg8[%c0_49, %c0_50], %106 {strides = array<i32>} : memref<8x128xf32, #tpu.memory_space<vmem>>, vector<8x128xf32>,
      %c0_51 = arith.constant 0 : index
      %c0_52 = arith.constant 0 : index
      %108 = vector.load %arg5[%c0_51, %c0_52] : memref<8x128xf32, #tpu.memory_space<vmem>>, vector<8x128xf32>
      %c0_53 = arith.constant 0 : index
      %c0_54 = arith.constant 0 : index
      %109 = vector.load %arg9[%c0_53, %c0_54] : memref<8x128xf32, #tpu.memory_space<vmem>>, vector<8x128xf32>
      tpu.vector_store %arg9[%c0_53, %c0_54], %108 {strides = array<i32>} : memref<8x128xf32, #tpu.memory_space<vmem>>, vector<8x128xf32>,
      %c0_55 = arith.constant 0 : index
      %c0_56 = arith.constant 0 : index
      %110 = vector.load %arg6[%c0_55, %c0_56] : memref<8x128xf32, #tpu.memory_space<vmem>>, vector<8x128xf32>
      %c0_57 = arith.constant 0 : index
      %c0_58 = arith.constant 0 : index
      %111 = vector.load %arg10[%c0_57, %c0_58] : memref<8x128xf32, #tpu.memory_space<vmem>>, vector<8x128xf32>
      tpu.vector_store %arg10[%c0_57, %c0_58], %110 {strides = array<i32>} : memref<8x128xf32, #tpu.memory_space<vmem>>, vector<8x128xf32>,
    } else {
    }
    %c0 = arith.constant 0 : index
    %c0_1 = arith.constant 0 : index
    %3 = memref.load %arg2[%c0, %c0_1] : memref<1x1xf32, #tpu.memory_space<smem>>
    %c0_2 = arith.constant 0 : index
    %c0_3 = arith.constant 0 : index
    %c0_4 = arith.constant 0 : index
    %4 = vector.load %arg3[%c0_2, %c0_3, %c0_4] : memref<1x8x128xf32, #tpu.memory_space<vmem>>, vector<1x8x128xf32>
    %5 = vector.shape_cast %4 : vector<1x8x128xf32> to vector<8x128xf32>
    %c0_5 = arith.constant 0 : index
    %c0_6 = arith.constant 0 : index
    %6 = vector.load %arg8[%c0_5, %c0_6] : memref<8x128xf32, #tpu.memory_space<vmem>>, vector<8x128xf32>
    %c0_7 = arith.constant 0 : index
    %c0_8 = arith.constant 0 : index
    %7 = vector.load %arg9[%c0_7, %c0_8] : memref<8x128xf32, #tpu.memory_space<vmem>>, vector<8x128xf32>
    %c0_9 = arith.constant 0 : index
    %c0_10 = arith.constant 0 : index
    %8 = vector.load %arg10[%c0_9, %c0_10] : memref<8x128xf32, #tpu.memory_space<vmem>>, vector<8x128xf32>
    %cst = arith.constant 4.000000e+01 : f32
    %9 = vector.broadcast %cst : f32 to vector<8x128xf32>
    %10 = arith.addf %5, %9 : vector<8x128xf32>
    %cst_11 = arith.constant 5.500000e+01 : f32
    %11 = vector.broadcast %cst_11 : f32 to vector<8x128xf32>
    %12 = arith.addf %5, %11 : vector<8x128xf32>
    %cst_12 = arith.constant 6.500000e+01 : f32
    %13 = vector.broadcast %cst_12 : f32 to vector<8x128xf32>
    %14 = arith.addf %5, %13 : vector<8x128xf32>
    %cst_13 = arith.constant 1.000000e-01 : f32
    %15 = vector.broadcast %cst_13 : f32 to vector<8x128xf32>
    %16 = arith.mulf %15, %10 : vector<8x128xf32>
    %cst_14 = arith.constant -1.000000e-01 : f32
    %17 = vector.broadcast %cst_14 : f32 to vector<8x128xf32>
    %18 = arith.mulf %10, %17 : vector<8x128xf32>
    %19 = math.exp %18 : vector<8x128xf32>
    %cst_15 = arith.constant 1.000000e+00 : f32
    %20 = vector.broadcast %cst_15 : f32 to vector<8x128xf32>
    %21 = arith.subf %20, %19 : vector<8x128xf32>
    %22 = arith.divf %16, %21 : vector<8x128xf32>
    %cst_16 = arith.constant -0.055555556 : f32
    %23 = vector.broadcast %cst_16 : f32 to vector<8x128xf32>
    %24 = arith.mulf %14, %23 : vector<8x128xf32>
    %25 = math.exp %24 : vector<8x128xf32>
    %cst_17 = arith.constant 4.000000e+00 : f32
    %26 = vector.broadcast %cst_17 : f32 to vector<8x128xf32>
    %27 = arith.mulf %26, %25 : vector<8x128xf32>
    %cst_18 = arith.constant -5.000000e-02 : f32
    %28 = vector.broadcast %cst_18 : f32 to vector<8x128xf32>
    %29 = arith.mulf %14, %28 : vector<8x128xf32>
    %30 = math.exp %29 : vector<8x128xf32>
    %cst_19 = arith.constant 7.000000e-02 : f32
    %31 = vector.broadcast %cst_19 : f32 to vector<8x128xf32>
    %32 = arith.mulf %31, %30 : vector<8x128xf32>
    %cst_20 = arith.constant 3.500000e+01 : f32
    %33 = vector.broadcast %cst_20 : f32 to vector<8x128xf32>
    %34 = arith.addf %5, %33 : vector<8x128xf32>
    %cst_21 = arith.constant 5.000000e-02 : f32
    %35 = vector.broadcast %cst_21 : f32 to vector<8x128xf32>
    %36 = arith.mulf %34, %35 : vector<8x128xf32>
    %37 = math.tanh %36 : vector<8x128xf32>
    %cst_22 = arith.constant 1.000000e+00 : f32
    %38 = vector.broadcast %cst_22 : f32 to vector<8x128xf32>
    %39 = arith.addf %38, %37 : vector<8x128xf32>
    %cst_23 = arith.constant 5.000000e-01 : f32
    %40 = vector.broadcast %cst_23 : f32 to vector<8x128xf32>
    %41 = arith.mulf %40, %39 : vector<8x128xf32>
    %cst_24 = arith.constant 0.00999999977 : f32
    %42 = vector.broadcast %cst_24 : f32 to vector<8x128xf32>
    %43 = arith.mulf %42, %12 : vector<8x128xf32>
    %cst_25 = arith.constant -1.000000e-01 : f32
    %44 = vector.broadcast %cst_25 : f32 to vector<8x128xf32>
    %45 = arith.mulf %12, %44 : vector<8x128xf32>
    %46 = math.exp %45 : vector<8x128xf32>
    %cst_26 = arith.constant 1.000000e+00 : f32
    %47 = vector.broadcast %cst_26 : f32 to vector<8x128xf32>
    %48 = arith.subf %47, %46 : vector<8x128xf32>
    %49 = arith.divf %43, %48 : vector<8x128xf32>
    %cst_27 = arith.constant -1.250000e-02 : f32
    %50 = vector.broadcast %cst_27 : f32 to vector<8x128xf32>
    %51 = arith.mulf %14, %50 : vector<8x128xf32>
    %52 = math.exp %51 : vector<8x128xf32>
    %cst_28 = arith.constant 1.250000e-01 : f32
    %53 = vector.broadcast %cst_28 : f32 to vector<8x128xf32>
    %54 = arith.mulf %53, %52 : vector<8x128xf32>
    %cst_29 = arith.constant 1.000000e+00 : f32
    %55 = vector.broadcast %cst_29 : f32 to vector<8x128xf32>
    %56 = arith.subf %55, %6 : vector<8x128xf32>
    %57 = arith.mulf %22, %56 : vector<8x128xf32>
    %58 = arith.mulf %27, %6 : vector<8x128xf32>
    %59 = arith.subf %57, %58 : vector<8x128xf32>
    %60 = vector.broadcast %3 : f32 to vector<8x128xf32>
    %61 = arith.mulf %60, %59 : vector<8x128xf32>
    %62 = arith.addf %6, %61 : vector<8x128xf32>
    %cst_30 = arith.constant 1.000000e+00 : f32
    %63 = vector.broadcast %cst_30 : f32 to vector<8x128xf32>
    %64 = arith.subf %63, %7 : vector<8x128xf32>
    %65 = arith.mulf %32, %64 : vector<8x128xf32>
    %66 = arith.mulf %41, %7 : vector<8x128xf32>
    %67 = arith.subf %65, %66 : vector<8x128xf32>
    %68 = vector.broadcast %3 : f32 to vector<8x128xf32>
    %69 = arith.mulf %68, %67 : vector<8x128xf32>
    %70 = arith.addf %7, %69 : vector<8x128xf32>
    %cst_31 = arith.constant 1.000000e+00 : f32
    %71 = vector.broadcast %cst_31 : f32 to vector<8x128xf32>
    %72 = arith.subf %71, %8 : vector<8x128xf32>
    %73 = arith.mulf %49, %72 : vector<8x128xf32>
    %74 = arith.mulf %54, %8 : vector<8x128xf32>
    %75 = arith.subf %73, %74 : vector<8x128xf32>
    %76 = vector.broadcast %3 : f32 to vector<8x128xf32>
    %77 = arith.mulf %76, %75 : vector<8x128xf32>
    %78 = arith.addf %8, %77 : vector<8x128xf32>
    %79 = arith.mulf %62, %62 : vector<8x128xf32>
    %80 = arith.mulf %78, %78 : vector<8x128xf32>
    %81 = arith.mulf %79, %62 : vector<8x128xf32>
    %cst_32 = arith.constant 1.200000e+02 : f32
    %82 = vector.broadcast %cst_32 : f32 to vector<8x128xf32>
    %83 = arith.mulf %82, %81 : vector<8x128xf32>
    %84 = arith.mulf %83, %70 : vector<8x128xf32>
    %cst_33 = arith.constant 5.000000e+01 : f32
    %85 = vector.broadcast %cst_33 : f32 to vector<8x128xf32>
    %86 = arith.subf %5, %85 : vector<8x128xf32>
    %87 = arith.mulf %84, %86 : vector<8x128xf32>
    %88 = arith.mulf %80, %80 : vector<8x128xf32>
    %cst_34 = arith.constant 3.600000e+01 : f32
    %89 = vector.broadcast %cst_34 : f32 to vector<8x128xf32>
    %90 = arith.mulf %89, %88 : vector<8x128xf32>
    %cst_35 = arith.constant -7.700000e+01 : f32
    %91 = vector.broadcast %cst_35 : f32 to vector<8x128xf32>
    %92 = arith.subf %5, %91 : vector<8x128xf32>
    %93 = arith.mulf %90, %92 : vector<8x128xf32>
    %cst_36 = arith.constant -5.440000e+01 : f32
    %94 = vector.broadcast %cst_36 : f32 to vector<8x128xf32>
    %95 = arith.subf %5, %94 : vector<8x128xf32>
    %cst_37 = arith.constant 3.000000e-01 : f32
    %96 = vector.broadcast %cst_37 : f32 to vector<8x128xf32>
    %97 = arith.mulf %96, %95 : vector<8x128xf32>
    %98 = arith.addf %87, %93 : vector<8x128xf32>
    %99 = arith.addf %98, %97 : vector<8x128xf32>
    %c0_38 = arith.constant 0 : index
    %c0_39 = arith.constant 0 : index
    %c0_40 = arith.constant 0 : index
    %100 = vector.load %arg7[%c0_38, %c0_39, %c0_40] : memref<1x8x128xf32, #tpu.memory_space<vmem>>, vector<1x8x128xf32>
    %101 = vector.shape_cast %100 : vector<1x8x128xf32> to vector<8x128xf32>
    %102 = vector.shape_cast %99 : vector<8x128xf32> to vector<1x8x128xf32>
    tpu.vector_store %arg7[%c0_38, %c0_39, %c0_40], %102 {strides = array<i32>} : memref<1x8x128xf32, #tpu.memory_space<vmem>>, vector<1x8x128xf32>,
    %c0_41 = arith.constant 0 : index
    %c0_42 = arith.constant 0 : index
    %103 = vector.load %arg8[%c0_41, %c0_42] : memref<8x128xf32, #tpu.memory_space<vmem>>, vector<8x128xf32>
    tpu.vector_store %arg8[%c0_41, %c0_42], %62 {strides = array<i32>} : memref<8x128xf32, #tpu.memory_space<vmem>>, vector<8x128xf32>,
    %c0_43 = arith.constant 0 : index
    %c0_44 = arith.constant 0 : index
    %104 = vector.load %arg9[%c0_43, %c0_44] : memref<8x128xf32, #tpu.memory_space<vmem>>, vector<8x128xf32>
    tpu.vector_store %arg9[%c0_43, %c0_44], %70 {strides = array<i32>} : memref<8x128xf32, #tpu.memory_space<vmem>>, vector<8x128xf32>,
    %c0_45 = arith.constant 0 : index
    %c0_46 = arith.constant 0 : index
    %105 = vector.load %arg10[%c0_45, %c0_46] : memref<8x128xf32, #tpu.memory_space<vmem>>, vector<8x128xf32>
    tpu.vector_store %arg10[%c0_45, %c0_46], %78 {strides = array<i32>} : memref<8x128xf32, #tpu.memory_space<vmem>>, vector<8x128xf32>,
    return
  }
  func.func @transform_0(%arg0: i32, %arg1: i32) -> (i32, i32) {
    %c0_i32 = arith.constant 0 : i32
    %c0_i32_0 = arith.constant 0 : i32
    %c0_i32_1 = arith.constant 0 : i32
    return %c0_i32, %c0_i32_0 : i32, i32
  }
  func.func @transform_1(%arg0: i32, %arg1: i32) -> (i32, i32, i32) {
    %c0_i32 = arith.constant 0 : i32
    %c0_i32_0 = arith.constant 0 : i32
    return %arg1, %arg0, %c0_i32 : i32, i32, i32
  }
  func.func @transform_2(%arg0: i32, %arg1: i32) -> (i32, i32) {
    %c0_i32 = arith.constant 0 : i32
    %c0_i32_0 = arith.constant 0 : i32
    return %arg0, %c0_i32 : i32, i32
  }
  func.func @transform_3(%arg0: i32, %arg1: i32) -> (i32, i32) {
    %c0_i32 = arith.constant 0 : i32
    %c0_i32_0 = arith.constant 0 : i32
    return %arg0, %c0_i32 : i32, i32
  }
  func.func @transform_4(%arg0: i32, %arg1: i32) -> (i32, i32) {
    %c0_i32 = arith.constant 0 : i32
    %c0_i32_0 = arith.constant 0 : i32
    return %arg0, %c0_i32 : i32, i32
  }
  func.func @transform_5(%arg0: i32, %arg1: i32) -> (i32, i32, i32) {
    %c0_i32 = arith.constant 0 : i32
    %c0_i32_0 = arith.constant 0 : i32
    return %arg1, %arg0, %c0_i32 : i32, i32, i32
  }
  func.func @transform_6(%arg0: i32, %arg1: i32) -> (i32, i32) {
    %c0_i32 = arith.constant 0 : i32
    %c0_i32_0 = arith.constant 0 : i32
    return %arg0, %c0_i32 : i32, i32
  }
  func.func @transform_7(%arg0: i32, %arg1: i32) -> (i32, i32) {
    %c0_i32 = arith.constant 0 : i32
    %c0_i32_0 = arith.constant 0 : i32
    return %arg0, %c0_i32 : i32, i32
  }
  func.func @transform_8(%arg0: i32, %arg1: i32) -> (i32, i32) {
    %c0_i32 = arith.constant 0 : i32
    %c0_i32_0 = arith.constant 0 : i32
    return %arg0, %c0_i32 : i32, i32
  }
}

</mosaic_0001>

<llo_original>
// kernel: _ionic_currents_slab.1
$region0: #{_ionic_currents_slab.1}
  #allocation0 [shape = 'u32[]', space=smem, size = 0x4, offset = 0x4, fixed_abs, tag = 'smem constant byte address 0x4 - core index']
  #allocation1 [shape = 'u32[72,128]{1,0:T(1,128)}', space=vmem, size = 0x9000, scoped, tag = 'internal scratch']
  #allocation2 [shape = 'f32[1,1]{1,0:T(1,128)S(6)}', space=smem, size = 0x200, scoped, tag = 'scoped memory for _ionic_currents_slab.1']
  %s0 = inlined_call_operand.<no memory space> [shape: f32[1,1], index: 0, kind: input, shape index: {}]
  %s1 = inlined_call_operand.hbm [shape: f32[1,16,128], index: 1, kind: input, shape index: {}]
  %s2 = inlined_call_operand.hbm [shape: f32[16,128], index: 2, kind: input, shape index: {}, may-alias: {2,6}]
  %s3 = inlined_call_operand.hbm [shape: f32[16,128], index: 3, kind: input, shape index: {}, may-alias: {3,7}]
  %s4 = inlined_call_operand.hbm [shape: f32[16,128], index: 4, kind: input, shape index: {}, may-alias: {4,8}]
  %s5 = inlined_call_operand.hbm [shape: f32[1,16,128], index: 5, kind: output, shape index: {0}]
  %s6 = inlined_call_operand.hbm [shape: f32[16,128], index: 6, kind: output, shape index: {1}, may-alias: {2,6}]
  %s7 = inlined_call_operand.hbm [shape: f32[16,128], index: 7, kind: output, shape index: {2}, may-alias: {3,7}]
  %s8 = inlined_call_operand.hbm [shape: f32[16,128], index: 8, kind: output, shape index: {3}, may-alias: {4,8}]
  %9 = xla_tuple %s5, %s6, %s7, %s8
  %s10 = sld [smem:[#allocation0]]
  $region97: #{_ionic_currents_slab.1} parent=0
    _
  %s12 = ssub.s32 1, %s10
  %s13 = scalar_select 0, %s12, %s10
  %14 = sst [smem:[#allocation2]] %s0
  $region1: #{_ionic_currents_slab.1} parent=0
    #allocation3 [shape = 'u8[8192]{0}', space=vmem, size = 0x2000, scoped, tag = 'input window, operand 1']
    #allocation4 [shape = 's32[2]{0}', space=sflag, size = 0x8, scoped, tag = 'scoped memory for _ionic_currents_slab.1']
    #allocation5 [shape = 's32[2]{0}', space=sflag, size = 0x8, scoped, tag = 'scoped memory for _ionic_currents_slab.1']
    #allocation6 [shape = 'u8[8192]{0}', space=vmem, size = 0x2000, scoped, tag = 'input window, operand 2']
    #allocation7 [shape = 's32[2]{0}', space=sflag, size = 0x8, scoped, tag = 'scoped memory for _ionic_currents_slab.1']
    #allocation8 [shape = 'u8[8192]{0}', space=vmem, size = 0x2000, scoped, tag = 'input window, operand 3']
    #allocation9 [shape = 'u8[8192]{0}', space=vmem, size = 0x2000, scoped, tag = 'input window, operand 4']
    #allocation10 [shape = 's32[2]{0}', space=sflag, size = 0x8, scoped, tag = 'scoped memory for _ionic_currents_slab.1']
    #allocation11 [shape = 'u8[8192]{0}', space=vmem, size = 0x2000, scoped, tag = 'output window, operand 0']
    #allocation12 [shape = 'u8[8192]{0}', space=vmem, size = 0x2000, scoped, tag = 'output window, operand 1']
    #allocation13 [shape = 's32[2]{0}', space=sflag, size = 0x8, scoped, tag = 'scoped memory for _ionic_currents_slab.1']
    #allocation14 [shape = 'u8[8192]{0}', space=vmem, size = 0x2000, scoped, tag = 'output window, operand 2']
    #allocation15 [shape = 'u8[8192]{0}', space=vmem, size = 0x2000, scoped, tag = 'output window, operand 3']
    #allocation16 [shape = 's32[2]{0}', space=sflag, size = 0x8, scoped, tag = 'scoped memory for _ionic_currents_slab.1']
    %15 = vsyncpa [#allocation4], 0
    %s16 = scalar_lea.sflag [#allocation4], 1
    %17 = vsyncpa %s16, 0
    %18 = vsyncpa [#allocation7], 0
    %s19 = scalar_lea.sflag [#allocation7], 1
    %20 = vsyncpa %s19, 0
    %21 = vsyncpa [#allocation10], 0
    %s22 = scalar_lea.sflag [#allocation10], 1
    %23 = vsyncpa %s22, 0
    %24 = vsyncpa [#allocation5], 0
    %s25 = scalar_lea.sflag [#allocation5], 1
    %26 = vsyncpa %s25, 0
    %27 = vsyncpa [#allocation13], 0
    %s28 = scalar_lea.sflag [#allocation13], 1
    %29 = vsyncpa %s28, 0
    %30 = vsyncpa [#allocation16], 0
    %s31 = scalar_lea.sflag [#allocation16], 1
    %32 = vsyncpa %s31, 0
    loop: start=0, step=1, limit=4
    $region2: #{_ionic_currents_slab.1} parent=1 // loop_pre_header
      _
    $region3: #{_ionic_currents_slab.1} parent=1 // loop_header
      %s34 = sphi 0, %s38
      %p35 = scmp.ge.s32.totalorder %s34, 4
      %s41 = sphi 0, %s53
      %s42 = sphi 0, %s49
      %s43 = sphi 0, %s41
      %s44 = sphi 0, %s42
      %s45 = sphi 0, %s43
      %s46 = sphi 0, %s44
      %s54 = sphi 0, %s54
      %s56 = sphi 0, %s54
      %s57 = sphi 0, %s56
      %s71 = sphi 0, %s57
      %s79 = sphi 0, %s81
      %s82 = sphi 0, %s79
      %s83 = sphi 0, %s82
      %s99 = sphi 0, %s83
      %s105 = sphi 0, %s107
      %s108 = sphi 0, %s105
      %s109 = sphi 0, %s108
      %s125 = sphi 0, %s109
      %s131 = sphi 0, %s133
      %s134 = sphi 0, %s131
      %s135 = sphi 0, %s134
      %s151 = sphi 0, %s135
      %s157 = sphi 0, %s159
      %s160 = sphi 0, %s157
      %s161 = sphi 0, %s160
      %s177 = sphi 0, %s161
      %s185 = sphi 0, %s187
      %s188 = sphi 0, %s185
      %s189 = sphi 0, %s188
      %s205 = sphi 0, %s189
      %s211 = sphi 0, %s213
      %s214 = sphi 0, %s211
      %s215 = sphi 0, %s214
      %s231 = sphi 0, %s215
      %s237 = sphi 0, %s239
      %s240 = sphi 0, %s237
      %s241 = sphi 0, %s240
      %s257 = sphi 0, %s241
      %s263 = sphi 0, %s265
      %s266 = sphi 0, %s263
      %s267 = sphi 0, %s266
      %s283 = sphi 0, %s267
    $region4: #{_ionic_currents_slab.1} parent=1 // loop_header_branch
      %37 = sbr.rel (%p35) target = $region8
    $region5: #{_ionic_currents_slab.1} parent=1 // loop_body
      %s39 = ssub.s32 %s34, 1
      %s40 = ssub.s32 %s34, 2
      %s47 = sadd.s32 1, %s42
      %p48 = scmp.ge.s32.totalorder %s47, 1
      %s49 = scalar_select %p48, 0, %s47
      %s50 = sadd.s32 1, %s41
      %s51 = scalar_select %p48, %s50, %s41
      %p52 = scmp.ge.s32.totalorder %s51, 2
      %s53 = scalar_select %p52, 0, %s51
      %s55 = sadd.s32 %s54, 1
      %p58 = scmp.eq.s32.totalorder %s34, 1
      %p59 = scmp.ne.s32.totalorder %s54, %s56
      %p60 = scmp.eq.s32.totalorder %s34, 0
      %p61 = por %p59, %p60
      %p62 = scmp.ne.s32.totalorder %s54, %s56
      %p63 = scmp.eq.s32.totalorder %s39, 1
      %p64 = por %p62, %p63
      %p65 = scmp.ne.s32.totalorder %s56, %s57
      %p66 = scmp.eq.s32.totalorder %s39, 0
      %p67 = por %p65, %p66
      %p68 = scmp.ne.s32.totalorder %s56, %s57
      %p69 = scmp.eq.s32.totalorder %s40, 1
      %p70 = por %p68, %p69
      %p72 = scmp.ne.s32.totalorder %s57, %s71
      %p73 = scmp.eq.s32.totalorder %s40, 0
      %p74 = por %p72, %p73
      %s75 = ssub.s32 %s42, %s49
      %s76 = ssub.s32 %s41, %s53
      %s77 = sor.u32 %s75, %s76
      %p78 = scmp.eq.s32.totalorder %s77, 0
      %s80 = sadd.s32 %s79, 1
      %s81 = scalar_select %p78, %s79, %s80
      %p84 = pneg %p78
      %p85 = scmp.eq.s32.totalorder %s34, 1
      %p86 = por %p84, %p85
      %p87 = scmp.ne.s32.totalorder %s79, %s82
      %p88 = scmp.eq.s32.totalorder %s34, 0
      %p89 = por %p87, %p88
      %p90 = scmp.ne.s32.totalorder %s79, %s82
      %p91 = scmp.eq.s32.totalorder %s39, 1
      %p92 = por %p90, %p91
      %p93 = scmp.ne.s32.totalorder %s82, %s83
      %p94 = scmp.eq.s32.totalorder %s39, 0
      %p95 = por %p93, %p94
      %p96 = scmp.ne.s32.totalorder %s82, %s83
      %p97 = scmp.eq.s32.totalorder %s40, 1
      %p98 = por %p96, %p97
      %p100 = scmp.ne.s32.totalorder %s83, %s99
      %p101 = scmp.eq.s32.totalorder %s40, 0
      %p102 = por %p100, %p101
      %s103 = ssub.s32 %s41, %s53
      %p104 = scmp.eq.s32.totalorder %s103, 0
      %s106 = sadd.s32 %s105, 1
      %s107 = scalar_select %p104, %s105, %s106
      %p110 = pneg %p104
      %p111 = scmp.eq.s32.totalorder %s34, 1
      %p112 = por %p110, %p111
      %p113 = scmp.ne.s32.totalorder %s105, %s108
      %p114 = scmp.eq.s32.totalorder %s34, 0
      %p115 = por %p113, %p114
      %p116 = scmp.ne.s32.totalorder %s105, %s108
      %p117 = scmp.eq.s32.totalorder %s39, 1
      %p118 = por %p116, %p117
      %p119 = scmp.ne.s32.totalorder %s108, %s109
      %p120 = scmp.eq.s32.totalorder %s39, 0
      %p121 = por %p119, %p120
      %p122 = scmp.ne.s32.totalorder %s108, %s109
      %p123 = scmp.eq.s32.totalorder %s40, 1
      %p124 = por %p122, %p123
      %p126 = scmp.ne.s32.totalorder %s109, %s125
      %p127 = scmp.eq.s32.totalorder %s40, 0
      %p128 = por %p126, %p127
      %s129 = ssub.s32 %s41, %s53
      %p130 = scmp.eq.s32.totalorder %s129, 0
      %s132 = sadd.s32 %s131, 1
      %s133 = scalar_select %p130, %s131, %s132
      %p136 = pneg %p130
      %p137 = scmp.eq.s32.totalorder %s34, 1
      %p138 = por %p136, %p137
      %p139 = scmp.ne.s32.totalorder %s131, %s134
      %p140 = scmp.eq.s32.totalorder %s34, 0
      %p141 = por %p139, %p140
      %p142 = scmp.ne.s32.totalorder %s131, %s134
      %p143 = scmp.eq.s32.totalorder %s39, 1
      %p144 = por %p142, %p143
      %p145 = scmp.ne.s32.totalorder %s134, %s135
      %p146 = scmp.eq.s32.totalorder %s39, 0
      %p147 = por %p145, %p146
      %p148 = scmp.ne.s32.totalorder %s134, %s135
      %p149 = scmp.eq.s32.totalorder %s40, 1
      %p150 = por %p148, %p149
      %p152 = scmp.ne.s32.totalorder %s135, %s151
      %p153 = scmp.eq.s32.totalorder %s40, 0
      %p154 = por %p152, %p153
      %s155 = ssub.s32 %s41, %s53
      %p156 = scmp.eq.s32.totalorder %s155, 0
      %s158 = sadd.s32 %s157, 1
      %s159 = scalar_select %p156, %s157, %s158
      %p162 = pneg %p156
      %p163 = scmp.eq.s32.totalorder %s34, 1
      %p164 = por %p162, %p163
      %p165 = scmp.ne.s32.totalorder %s157, %s160
      %p166 = scmp.eq.s32.totalorder %s34, 0
      %p167 = por %p165, %p166
      %p168 = scmp.ne.s32.totalorder %s157, %s160
      %p169 = scmp.eq.s32.totalorder %s39, 1
      %p170 = por %p168, %p169
      %p171 = scmp.ne.s32.totalorder %s160, %s161
      %p172 = scmp.eq.s32.totalorder %s39, 0
      %p173 = por %p171, %p172
      %p174 = scmp.ne.s32.totalorder %s160, %s161
      %p175 = scmp.eq.s32.totalorder %s40, 1
      %p176 = por %p174, %p175
      %p178 = scmp.ne.s32.totalorder %s161, %s177
      %p179 = scmp.eq.s32.totalorder %s40, 0
      %p180 = por %p178, %p179
      %s181 = ssub.s32 %s42, %s49
      %s182 = ssub.s32 %s41, %s53
      %s183 = sor.u32 %s181, %s182
      %p184 = scmp.eq.s32.totalorder %s183, 0
      %s186 = sadd.s32 %s185, 1
      %s187 = scalar_select %p184, %s185, %s186
      %p190 = pneg %p184
      %p191 = scmp.eq.s32.totalorder %s34, 1
      %p192 = por %p190, %p191
      %p193 = scmp.ne.s32.totalorder %s185, %s188
      %p194 = scmp.eq.s32.totalorder %s34, 0
      %p195 = por %p193, %p194
      %p196 = scmp.ne.s32.totalorder %s185, %s188
      %p197 = scmp.eq.s32.totalorder %s39, 1
      %p198 = por %p196, %p197
      %p199 = scmp.ne.s32.totalorder %s188, %s189
      %p200 = scmp.eq.s32.totalorder %s39, 0
      %p201 = por %p199, %p200
      %p202 = scmp.ne.s32.totalorder %s188, %s189
      %p203 = scmp.eq.s32.totalorder %s40, 1
      %p204 = por %p202, %p203
      %p206 = scmp.ne.s32.totalorder %s189, %s205
      %p207 = scmp.eq.s32.totalorder %s40, 0
      %p208 = por %p206, %p207
      %s209 = ssub.s32 %s41, %s53
      %p210 = scmp.eq.s32.totalorder %s209, 0
      %s212 = sadd.s32 %s211, 1
      %s213 = scalar_select %p210, %s211, %s212
      %p216 = pneg %p210
      %p217 = scmp.eq.s32.totalorder %s34, 1
      %p218 = por %p216, %p217
      %p219 = scmp.ne.s32.totalorder %s211, %s214
      %p220 = scmp.eq.s32.totalorder %s34, 0
      %p221 = por %p219, %p220
      %p222 = scmp.ne.s32.totalorder %s211, %s214
      %p223 = scmp.eq.s32.totalorder %s39, 1
      %p224 = por %p222, %p223
      %p225 = scmp.ne.s32.totalorder %s214, %s215
      %p226 = scmp.eq.s32.totalorder %s39, 0
      %p227 = por %p225, %p226
      %p228 = scmp.ne.s32.totalorder %s214, %s215
      %p229 = scmp.eq.s32.totalorder %s40, 1
      %p230 = por %p228, %p229
      %p232 = scmp.ne.s32.totalorder %s215, %s231
      %p233 = scmp.eq.s32.totalorder %s40, 0
      %p234 = por %p232, %p233
      %s235 = ssub.s32 %s41, %s53
      %p236 = scmp.eq.s32.totalorder %s235, 0
      %s238 = sadd.s32 %s237, 1
      %s239 = scalar_select %p236, %s237, %s238
      %p242 = pneg %p236
      %p243 = scmp.eq.s32.totalorder %s34, 1
      %p244 = por %p242, %p243
      %p245 = scmp.ne.s32.totalorder %s237, %s240
      %p246 = scmp.eq.s32.totalorder %s34, 0
      %p247 = por %p245, %p246
      %p248 = scmp.ne.s32.totalorder %s237, %s240
      %p249 = scmp.eq.s32.totalorder %s39, 1
      %p250 = por %p248, %p249
      %p251 = scmp.ne.s32.totalorder %s240, %s241
      %p252 = scmp.eq.s32.totalorder %s39, 0
      %p253 = por %p251, %p252
      %p254 = scmp.ne.s32.totalorder %s240, %s241
      %p255 = scmp.eq.s32.totalorder %s40, 1
      %p256 = por %p254, %p255
      %p258 = scmp.ne.s32.totalorder %s241, %s257
      %p259 = scmp.eq.s32.totalorder %s40, 0
      %p260 = por %p258, %p259
      %s261 = ssub.s32 %s41, %s53
      %p262 = scmp.eq.s32.totalorder %s261, 0
      %s264 = sadd.s32 %s263, 1
      %s265 = scalar_select %p262, %s263, %s264
      %p268 = pneg %p262
      %p269 = scmp.eq.s32.totalorder %s34, 1
      %p270 = por %p268, %p269
      %p271 = scmp.ne.s32.totalorder %s263, %s266
      %p272 = scmp.eq.s32.totalorder %s34, 0
      %p273 = por %p271, %p272
      %p274 = scmp.ne.s32.totalorder %s263, %s266
      %p275 = scmp.eq.s32.totalorder %s39, 1
      %p276 = por %p274, %p275
      %p277 = scmp.ne.s32.totalorder %s266, %s267
      %p278 = scmp.eq.s32.totalorder %s39, 0
      %p279 = por %p277, %p278
      %p280 = scmp.ne.s32.totalorder %s266, %s267
      %p281 = scmp.eq.s32.totalorder %s40, 1
      %p282 = por %p280, %p281
      %p284 = scmp.ne.s32.totalorder %s267, %s283
      %p285 = scmp.eq.s32.totalorder %s40, 0
      %p286 = por %p284, %p285
      %p287 = scmp.le.s32.totalorder 1, %s34
      %p288 = scmp.lt.s32.totalorder %s34, 3
      %p289 = pnand %p287, %p288
      %p290 = pneg %p289
      // Predicated region
      $region9: #{_ionic_currents_slab.1} parent=5 // pred_check
        _
      $region10: #{_ionic_currents_slab.1} parent=5 // pred_check_branch
        %292 = sbr.rel (%p289) target = $region12
      $region11: #{_ionic_currents_slab.1} parent=5 // pred_region
        %s293 = ssub.s32 %s34, 1
        // Predicated region
        $region13: #{_ionic_currents_slab.1} parent=11 // pred_check
          %p294 = pneg %p67
        $region14: #{_ionic_currents_slab.1} parent=11 // pred_check_branch
          %296 = sbr.rel (%p294) target = $region16
        $region15: #{_ionic_currents_slab.1} parent=11 // pred_region
          _
        $region16: #{_ionic_currents_slab.1} parent=11 // pred_fallthru
          _
      $region12: #{_ionic_currents_slab.1} parent=5 // pred_fallthru
        _
      %p297 = scmp.lt.s32.totalorder %s34, 2
      // Predicated region
      $region17: #{_ionic_currents_slab.1} parent=5 // pred_check
        %p298 = pneg %p297
      $region18: #{_ionic_currents_slab.1} parent=5 // pred_check_branch
        %300 = sbr.rel (%p298) target = $region20
      $region19: #{_ionic_currents_slab.1} parent=5 // pred_region
        // Predicated region
        $region21: #{_ionic_currents_slab.1} parent=19 // pred_check
          %p301 = pneg %p89
        $region22: #{_ionic_currents_slab.1} parent=19 // pred_check_branch
          %303 = sbr.rel (%p301) target = $region24
        $region23: #{_ionic_currents_slab.1} parent=19 // pred_region
          %s304 = sand.u32 %s79, 1
          %s305 = scalar_lea.sflag [#allocation4], %s304
          %s306 = sand.u32 %s79, 1
          %s307 = smul.addr %s306, 8
          %s308 = scalar_lea.vmem [#allocation3], %s307
          %310 = vsyncadd %s305, 0
          %s311 = smul.addr %s42, 2
          %s312 = sadd.s32 %s41, %s311
          %s313 = smul.addr %s312, 8
          %s314 = scalar_lea.hbm %s1, %s313
          %s316 = sshll.u32 %s314, 4
          %s317 = int_to_ptr.hbm [resolvable:$true] %s316
          %s318 = sshll.u32 %s308, 4
          %s319 = int_to_ptr.vmem [resolvable:$true] %s318
          %321 = dma.hbm_to_vmem [thread:$0]  %s317, 128, %s319, %s305
        $region24: #{_ionic_currents_slab.1} parent=19 // pred_fallthru
          _
        // Predicated region
        $region25: #{_ionic_currents_slab.1} parent=19 // pred_check
          %p322 = pneg %p115
        $region26: #{_ionic_currents_slab.1} parent=19 // pred_check_branch
          %324 = sbr.rel (%p322) target = $region28
        $region27: #{_ionic_currents_slab.1} parent=19 // pred_region
          %s325 = sand.u32 %s34, 1
          %s326 = scalar_lea.sflag [#allocation7], %s325
          %s327 = sand.u32 %s105, 1
          %s328 = smul.addr %s327, 8
          %s329 = scalar_lea.vmem [#allocation6], %s328
          %331 = vsyncadd %s326, 0
          %s332 = smul.addr %s41, 8
          %s333 = scalar_lea.hbm %s2, %s332
          %s335 = sshll.u32 %s333, 4
          %s336 = int_to_ptr.hbm [resolvable:$true] %s335
          %s337 = sshll.u32 %s329, 4
          %s338 = int_to_ptr.vmem [resolvable:$true] %s337
          %340 = dma.hbm_to_vmem [thread:$0]  %s336, 128, %s338, %s326
        $region28: #{_ionic_currents_slab.1} parent=19 // pred_fallthru
          _
        // Predicated region
        $region29: #{_ionic_currents_slab.1} parent=19 // pred_check
          %p341 = pneg %p141
        $region30: #{_ionic_currents_slab.1} parent=19 // pred_check_branch
          %343 = sbr.rel (%p341) target = $region32
        $region31: #{_ionic_currents_slab.1} parent=19 // pred_region
          %s344 = sand.u32 %s34, 1
          %s345 = scalar_lea.sflag [#allocation7], %s344
          %s346 = sand.u32 %s131, 1
          %s347 = smul.addr %s346, 8
          %s348 = scalar_lea.vmem [#allocation8], %s347
          %350 = vsyncadd %s345, 0
          %s351 = smul.addr %s41, 8
          %s352 = scalar_lea.hbm %s3, %s351
          %s354 = sshll.u32 %s352, 4
          %s355 = int_to_ptr.hbm [resolvable:$true] %s354
          %s356 = sshll.u32 %s348, 4
          %s357 = int_to_ptr.vmem [resolvable:$true] %s356
          %359 = dma.hbm_to_vmem [thread:$0]  %s355, 128, %s357, %s345
        $region32: #{_ionic_currents_slab.1} parent=19 // pred_fallthru
          _
        // Predicated region
        $region33: #{_ionic_currents_slab.1} parent=19 // pred_check
          %p360 = pneg %p167
        $region34: #{_ionic_currents_slab.1} parent=19 // pred_check_branch
          %362 = sbr.rel (%p360) target = $region36
        $region35: #{_ionic_currents_slab.1} parent=19 // pred_region
          %s363 = sand.u32 %s157, 1
          %s364 = scalar_lea.sflag [#allocation10], %s363
          %s365 = sand.u32 %s157, 1
          %s366 = smul.addr %s365, 8
          %s367 = scalar_lea.vmem [#allocation9], %s366
          %369 = vsyncadd %s364, 0
          %s370 = smul.addr %s41, 8
          %s371 = scalar_lea.hbm %s4, %s370
          %s373 = sshll.u32 %s371, 4
          %s374 = int_to_ptr.hbm [resolvable:$true] %s373
          %s375 = sshll.u32 %s367, 4
          %s376 = int_to_ptr.vmem [resolvable:$true] %s375
          %378 = dma.hbm_to_vmem [thread:$0]  %s374, 128, %s376, %s364
        $region36: #{_ionic_currents_slab.1} parent=19 // pred_fallthru
          _
      $region20: #{_ionic_currents_slab.1} parent=5 // pred_fallthru
        _
      %p379 = scmp.le.s32.totalorder 1, %s34
      %p380 = scmp.lt.s32.totalorder %s34, 3
      %p381 = pnand %p379, %p380
      %p382 = pneg %p381
      // Predicated region
      $region37: #{_ionic_currents_slab.1} parent=5 // pred_check
        _
      $region38: #{_ionic_currents_slab.1} parent=5 // pred_check_branch
        %384 = sbr.rel (%p381) target = $region40
      $region39: #{_ionic_currents_slab.1} parent=5 // pred_region
        %s385 = ssub.s32 %s34, 1
        %s386 = sand.u32 %s82, 1
        %s387 = scalar_lea.sflag [#allocation4], %s386
        %s388 = sand.u32 %s82, 1
        %s389 = smul.addr %s388, 8
        %s390 = scalar_lea.vmem [#allocation3], %s389
        // Predicated region
        $region41: #{_ionic_currents_slab.1} parent=39 // pred_check
          %p391 = pneg %p95
        $region42: #{_ionic_currents_slab.1} parent=39 // pred_check_branch
          %393 = sbr.rel (%p391) target = $region44
        $region43: #{_ionic_currents_slab.1} parent=39 // pred_region
          %395 = dma.done %s387, 128
        $region44: #{_ionic_currents_slab.1} parent=39 // pred_fallthru
          _
        %s396 = sand.u32 %s39, 1
        %s397 = scalar_lea.sflag [#allocation7], %s396
        %s398 = sand.u32 %s108, 1
        %s399 = smul.addr %s398, 8
        %s400 = scalar_lea.vmem [#allocation6], %s399
        // Predicated region
        $region45: #{_ionic_currents_slab.1} parent=39 // pred_check
          %p401 = pneg %p121
        $region46: #{_ionic_currents_slab.1} parent=39 // pred_check_branch
          %403 = sbr.rel (%p401) target = $region48
        $region47: #{_ionic_currents_slab.1} parent=39 // pred_region
          %405 = dma.done %s397, 128
        $region48: #{_ionic_currents_slab.1} parent=39 // pred_fallthru
          _
        %s406 = sand.u32 %s39, 1
        %s407 = scalar_lea.sflag [#allocation7], %s406
        %s408 = sand.u32 %s134, 1
        %s409 = smul.addr %s408, 8
        %s410 = scalar_lea.vmem [#allocation8], %s409
        // Predicated region
        $region49: #{_ionic_currents_slab.1} parent=39 // pred_check
          %p411 = pneg %p147
        $region50: #{_ionic_currents_slab.1} parent=39 // pred_check_branch
          %413 = sbr.rel (%p411) target = $region52
        $region51: #{_ionic_currents_slab.1} parent=39 // pred_region
          %415 = dma.done %s407, 128
        $region52: #{_ionic_currents_slab.1} parent=39 // pred_fallthru
          _
        %s416 = sand.u32 %s160, 1
        %s417 = scalar_lea.sflag [#allocation10], %s416
        %s418 = sand.u32 %s160, 1
        %s419 = smul.addr %s418, 8
        %s420 = scalar_lea.vmem [#allocation9], %s419
        // Predicated region
        $region53: #{_ionic_currents_slab.1} parent=39 // pred_check
          %p421 = pneg %p173
        $region54: #{_ionic_currents_slab.1} parent=39 // pred_check_branch
          %423 = sbr.rel (%p421) target = $region56
        $region55: #{_ionic_currents_slab.1} parent=39 // pred_region
          %425 = dma.done %s417, 128
        $region56: #{_ionic_currents_slab.1} parent=39 // pred_fallthru
          _
        %p426 = pneg %p67
        %p427 = pneg %p64
        %s428 = sand.u32 %s82, 1
        %s429 = scalar_lea.sflag [#allocation4], %s428
        %s430 = sand.u32 %s82, 1
        %s431 = smul.addr %s430, 8
        %s432 = scalar_lea.vmem [#allocation3], %s431
        %p433 = pneg %p95
        %p434 = pneg %p92
        %s435 = sand.u32 %s39, 1
        %s436 = scalar_lea.sflag [#allocation7], %s435
        %s437 = sand.u32 %s108, 1
        %s438 = smul.addr %s437, 8
        %s439 = scalar_lea.vmem [#allocation6], %s438
        %p440 = pneg %p121
        %p441 = pneg %p118
        %s442 = sand.u32 %s39, 1
        %s443 = scalar_lea.sflag [#allocation7], %s442
        %s444 = sand.u32 %s134, 1
        %s445 = smul.addr %s444, 8
        %s446 = scalar_lea.vmem [#allocation8], %s445
        %p447 = pneg %p147
        %p448 = pneg %p144
        %s449 = sand.u32 %s160, 1
        %s450 = scalar_lea.sflag [#allocation10], %s449
        %s451 = sand.u32 %s160, 1
        %s452 = smul.addr %s451, 8
        %s453 = scalar_lea.vmem [#allocation9], %s452
        %p454 = pneg %p173
        %p455 = pneg %p170
        %p456 = pneg %p201
        %p457 = pneg %p198
        %s458 = sand.u32 %s188, 1
        %s459 = scalar_lea.sflag [#allocation5], %s458
        %s460 = sand.u32 %s188, 1
        %s461 = smul.addr %s460, 8
        %s462 = scalar_lea.vmem [#allocation11], %s461
        %p463 = pneg %p227
        %p464 = pneg %p224
        %s465 = sand.u32 %s39, 1
        %s466 = scalar_lea.sflag [#allocation13], %s465
        %s467 = sand.u32 %s214, 1
        %s468 = smul.addr %s467, 8
        %s469 = scalar_lea.vmem [#allocation12], %s468
        %p470 = pneg %p253
        %p471 = pneg %p250
        %s472 = sand.u32 %s39, 1
        %s473 = scalar_lea.sflag [#allocation13], %s472
        %s474 = sand.u32 %s240, 1
        %s475 = smul.addr %s474, 8
        %s476 = scalar_lea.vmem [#allocation14], %s475
        %p477 = pneg %p279
        %p478 = pneg %p276
        %s479 = sand.u32 %s266, 1
        %s480 = scalar_lea.sflag [#allocation16], %s479
        %s481 = sand.u32 %s266, 1
        %s482 = smul.addr %s481, 8
        %s483 = scalar_lea.vmem [#allocation15], %s482
        %p484 = scmp.eq.s32.totalorder %s44, 0
        // Predicated region
        $region57: #{_ionic_currents_slab.1} parent=39 // pred_check
          %p485 = pneg %p484
        $region58: #{_ionic_currents_slab.1} parent=39 // pred_check_branch
          %487 = sbr.rel (%p485) target = $region60
        $region59: #{_ionic_currents_slab.1} parent=39 // pred_region
          %v488 = vld [vmem:[%s400] sm:$0xff]
          %489 = vst [vmem:[%s469] sm:$0xff] %v488
          %v490 = vld [vmem:[%s410] sm:$0xff]
          %491 = vst [vmem:[%s476] sm:$0xff] %v490
          %v492 = vld [vmem:[%s420] sm:$0xff]
          %493 = vst [vmem:[%s483] sm:$0xff] %v492
        $region60: #{_ionic_currents_slab.1} parent=39 // pred_fallthru
          _
        %s494 = sld [smem:[#allocation2]]
        %v495 = vld [vmem:[%s390] sm:$0xff]
        %v496 = vld [vmem:[%s469] sm:$0xff]
        %v497 = vld [vmem:[%s476] sm:$0xff]
        %v498 = vld [vmem:[%s483] sm:$0xff]
        %v499 = vadd.f32 %v495, 40.0
        %v500 = vadd.f32 %v495, 55.0
        %v501 = vadd.f32 %v495, 65.0
        %v502 = vmul.f32 %v499, 0.1
        %v503 = vmul.f32 %v499, -0.1
        %v504 = vmul.f32 %v503, 1.442695
        %v505 = vpow.pop %v504
        %v506 = vsub.f32 1.0, %v505
        %v507 = vrcp.pop %v506
        %v508 = vmul.f32 %v506, %v507
        %v509 = vsub.f32 1.0, %v508
        %v510 = vmul.f32 %v507, %v509
        %v511 = vadd.f32 %v507, %v510
        %vm512 = vweird.f32 %v506
        %vm513 = vweird.f32 %v507
        %vm514 = vmor %vm512, %vm513
        %v515 = vsel %vm514, %v507, %v511
        %v516 = vand.u32 2147483647, %v506
        %vm517 = vcmp.eq.f32.partialorder %v516, 8.507059e+37
        %v518 = vand.u32 %v506, 2147483648
        %v519 = vor.u32 1.1754944e-38, %v518
        %v520 = vsel %vm517, %v519, %v515
        %v521 = vmul.f32 %v502, %v520
        %v522 = vmul.f32 %v501, -0.055555556
        %v523 = vmul.f32 %v522, 1.442695
        %v524 = vpow.pop %v523
        %v525 = vmul.f32 %v524, 4.0
        %v526 = vmul.f32 %v501, -0.05
        %v527 = vmul.f32 %v526, 1.442695
        %v528 = vpow.pop %v527
        %v529 = vmul.f32 %v528, 0.07
        %v530 = vadd.f32 %v495, 35.0
        %v531 = vmul.f32 %v530, 0.05
        %v532 = vtanh.pop %v531
        %v533 = vadd.f32 %v532, 1.0
        %v534 = vmul.f32 %v533, 0.5
        %v535 = vmul.f32 %v500, 0.01
        %v536 = vmul.f32 %v500, -0.1
        %v537 = vmul.f32 %v536, 1.442695
        %v538 = vpow.pop %v537
        %v539 = vsub.f32 1.0, %v538
        %v540 = vrcp.pop %v539
        %v541 = vmul.f32 %v539, %v540
        %v542 = vsub.f32 1.0, %v541
        %v543 = vmul.f32 %v540, %v542
        %v544 = vadd.f32 %v540, %v543
        %vm545 = vweird.f32 %v539
        %vm546 = vweird.f32 %v540
        %vm547 = vmor %vm545, %vm546
        %v548 = vsel %vm547, %v540, %v544
        %v549 = vand.u32 2147483647, %v539
        %vm550 = vcmp.eq.f32.partialorder %v549, 8.507059e+37
        %v551 = vand.u32 %v539, 2147483648
        %v552 = vor.u32 1.1754944e-38, %v551
        %v553 = vsel %vm550, %v552, %v548
        %v554 = vmul.f32 %v535, %v553
        %v555 = vmul.f32 %v501, -0.0125
        %v556 = vmul.f32 %v555, 1.442695
        %v557 = vpow.pop %v556
        %v558 = vmul.f32 %v557, 0.125
        %v559 = vsub.f32 1.0, %v496
        %v560 = vmul.f32 %v521, %v559
        %v561 = vmul.f32 %v525, %v496
        %v562 = vsub.f32 %v560, %v561
        %v563 = vstv %s494
        %v564 = vmul.f32 %v563, %v562
        %v565 = vadd.f32 %v496, %v564
        %v566 = vsub.f32 1.0, %v497
        %v567 = vmul.f32 %v529, %v566
        %v568 = vmul.f32 %v534, %v497
        %v569 = vsub.f32 %v567, %v568
        %v570 = vmul.f32 %v563, %v569
        %v571 = vadd.f32 %v497, %v570
        %v572 = vsub.f32 1.0, %v498
        %v573 = vmul.f32 %v554, %v572
        %v574 = vmul.f32 %v558, %v498
        %v575 = vsub.f32 %v573, %v574
        %v576 = vmul.f32 %v563, %v575
        %v577 = vadd.f32 %v498, %v576
        %v578 = vmul.f32 %v565, %v565
        %v579 = vmul.f32 %v577, %v577
        %v580 = vmul.f32 %v578, %v565
        %v581 = vmul.f32 %v580, 120.0
        %v582 = vmul.f32 %v581, %v571
        %v583 = vsub.f32 %v495, 50.0
        %v584 = vmul.f32 %v582, %v583
        %v585 = vmul.f32 %v579, %v579
        %v586 = vmul.f32 %v585, 36.0
        %v587 = vsub.f32 %v495, -77.0
        %v588 = vmul.f32 %v586, %v587
        %v589 = vsub.f32 %v495, -54.4
        %v590 = vmul.f32 %v589, 0.3
        %v591 = vadd.f32 %v584, %v588
        %v592 = vadd.f32 %v591, %v590
        %593 = vst [vmem:[%s462] sm:$0xff] %v592
        %594 = vst [vmem:[%s469] sm:$0xff] %v565
        %595 = vst [vmem:[%s476] sm:$0xff] %v571
        %596 = vst [vmem:[%s483] sm:$0xff] %v577
        %s597 = sand.u32 %s188, 1
        %s598 = scalar_lea.sflag [#allocation5], %s597
        %s599 = sand.u32 %s188, 1
        %s600 = smul.addr %s599, 8
        %s601 = scalar_lea.vmem [#allocation11], %s600
        %s602 = sand.u32 %s39, 1
        %s603 = scalar_lea.sflag [#allocation13], %s602
        %s604 = sand.u32 %s214, 1
        %s605 = smul.addr %s604, 8
        %s606 = scalar_lea.vmem [#allocation12], %s605
        %s607 = sand.u32 %s39, 1
        %s608 = scalar_lea.sflag [#allocation13], %s607
        %s609 = sand.u32 %s240, 1
        %s610 = smul.addr %s609, 8
        %s611 = scalar_lea.vmem [#allocation14], %s610
        %s612 = sand.u32 %s266, 1
        %s613 = scalar_lea.sflag [#allocation16], %s612
        %s614 = sand.u32 %s266, 1
        %s615 = smul.addr %s614, 8
        %s616 = scalar_lea.vmem [#allocation15], %s615
        // Predicated region
        $region61: #{_ionic_currents_slab.1} parent=39 // pred_check
          %p617 = pneg %p198
        $region62: #{_ionic_currents_slab.1} parent=39 // pred_check_branch
          %619 = sbr.rel (%p617) target = $region64
        $region63: #{_ionic_currents_slab.1} parent=39 // pred_region
          %621 = vsyncadd %s598, 0
          %s622 = smul.addr %s44, 2
          %s623 = sadd.s32 %s43, %s622
          %s624 = smul.addr %s623, 8
          %s625 = scalar_lea.hbm %s5, %s624
          %s627 = sshll.u32 %s601, 4
          %s628 = int_to_ptr.vmem [resolvable:$true] %s627
          %s629 = sshll.u32 %s625, 4
          %s630 = int_to_ptr.hbm [resolvable:$true] %s629
          %632 = dma.vmem_to_hbm [thread:$0]  %s628, 128, %s630, %s598
        $region64: #{_ionic_currents_slab.1} parent=39 // pred_fallthru
          _
        // Predicated region
        $region65: #{_ionic_currents_slab.1} parent=39 // pred_check
          %p633 = pneg %p224
        $region66: #{_ionic_currents_slab.1} parent=39 // pred_check_branch
          %635 = sbr.rel (%p633) target = $region68
        $region67: #{_ionic_currents_slab.1} parent=39 // pred_region
          %637 = vsyncadd %s603, 0
          %s638 = smul.addr %s43, 8
          %s639 = scalar_lea.hbm %s6, %s638
          %s641 = sshll.u32 %s606, 4
          %s642 = int_to_ptr.vmem [resolvable:$true] %s641
          %s643 = sshll.u32 %s639, 4
          %s644 = int_to_ptr.hbm [resolvable:$true] %s643
          %646 = dma.vmem_to_hbm [thread:$0]  %s642, 128, %s644, %s603
        $region68: #{_ionic_currents_slab.1} parent=39 // pred_fallthru
          _
        // Predicated region
        $region69: #{_ionic_currents_slab.1} parent=39 // pred_check
          %p647 = pneg %p250
        $region70: #{_ionic_currents_slab.1} parent=39 // pred_check_branch
          %649 = sbr.rel (%p647) target = $region72
        $region71: #{_ionic_currents_slab.1} parent=39 // pred_region
          %651 = vsyncadd %s608, 0
          %s652 = smul.addr %s43, 8
          %s653 = scalar_lea.hbm %s7, %s652
          %s655 = sshll.u32 %s611, 4
          %s656 = int_to_ptr.vmem [resolvable:$true] %s655
          %s657 = sshll.u32 %s653, 4
          %s658 = int_to_ptr.hbm [resolvable:$true] %s657
          %660 = dma.vmem_to_hbm [thread:$0]  %s656, 128, %s658, %s608
        $region72: #{_ionic_currents_slab.1} parent=39 // pred_fallthru
          _
        // Predicated region
        $region73: #{_ionic_currents_slab.1} parent=39 // pred_check
          %p661 = pneg %p276
        $region74: #{_ionic_currents_slab.1} parent=39 // pred_check_branch
          %663 = sbr.rel (%p661) target = $region76
        $region75: #{_ionic_currents_slab.1} parent=39 // pred_region
          %665 = vsyncadd %s613, 0
          %s666 = smul.addr %s43, 8
          %s667 = scalar_lea.hbm %s8, %s666
          %s669 = sshll.u32 %s616, 4
          %s670 = int_to_ptr.vmem [resolvable:$true] %s669
          %s671 = sshll.u32 %s667, 4
          %s672 = int_to_ptr.hbm [resolvable:$true] %s671
          %674 = dma.vmem_to_hbm [thread:$0]  %s670, 128, %s672, %s613
        $region76: #{_ionic_currents_slab.1} parent=39 // pred_fallthru
          _
      $region40: #{_ionic_currents_slab.1} parent=5 // pred_fallthru
        _
      %p675 = scmp.le.s32.totalorder 2, %s34
      // Predicated region
      $region77: #{_ionic_currents_slab.1} parent=5 // pred_check
        %p676 = pneg %p675
      $region78: #{_ionic_currents_slab.1} parent=5 // pred_check_branch
        %678 = sbr.rel (%p676) target = $region80
      $region79: #{_ionic_currents_slab.1} parent=5 // pred_region
        %s679 = ssub.s32 %s34, 2
        // Predicated region
        $region81: #{_ionic_currents_slab.1} parent=79 // pred_check
          %p680 = pneg %p204
        $region82: #{_ionic_currents_slab.1} parent=79 // pred_check_branch
          %682 = sbr.rel (%p680) target = $region84
        $region83: #{_ionic_currents_slab.1} parent=79 // pred_region
          %s683 = sand.u32 %s189, 1
          %s684 = scalar_lea.sflag [#allocation5], %s683
          %s685 = sand.u32 %s189, 1
          %s686 = smul.addr %s685, 8
          %s687 = scalar_lea.vmem [#allocation11], %s686
          %689 = dma.done %s684, 128
        $region84: #{_ionic_currents_slab.1} parent=79 // pred_fallthru
          _
        // Predicated region
        $region85: #{_ionic_currents_slab.1} parent=79 // pred_check
          %p690 = pneg %p230
        $region86: #{_ionic_currents_slab.1} parent=79 // pred_check_branch
          %692 = sbr.rel (%p690) target = $region88
        $region87: #{_ionic_currents_slab.1} parent=79 // pred_region
          %s693 = sand.u32 %s40, 1
          %s694 = scalar_lea.sflag [#allocation13], %s693
          %s695 = sand.u32 %s215, 1
          %s696 = smul.addr %s695, 8
          %s697 = scalar_lea.vmem [#allocation12], %s696
          %699 = dma.done %s694, 128
        $region88: #{_ionic_currents_slab.1} parent=79 // pred_fallthru
          _
        // Predicated region
        $region89: #{_ionic_currents_slab.1} parent=79 // pred_check
          %p700 = pneg %p256
        $region90: #{_ionic_currents_slab.1} parent=79 // pred_check_branch
          %702 = sbr.rel (%p700) target = $region92
        $region91: #{_ionic_currents_slab.1} parent=79 // pred_region
          %s703 = sand.u32 %s40, 1
          %s704 = scalar_lea.sflag [#allocation13], %s703
          %s705 = sand.u32 %s241, 1
          %s706 = smul.addr %s705, 8
          %s707 = scalar_lea.vmem [#allocation14], %s706
          %709 = dma.done %s704, 128
        $region92: #{_ionic_currents_slab.1} parent=79 // pred_fallthru
          _
        // Predicated region
        $region93: #{_ionic_currents_slab.1} parent=79 // pred_check
          %p710 = pneg %p282
        $region94: #{_ionic_currents_slab.1} parent=79 // pred_check_branch
          %712 = sbr.rel (%p710) target = $region96
        $region95: #{_ionic_currents_slab.1} parent=79 // pred_region
          %s713 = sand.u32 %s267, 1
          %s714 = scalar_lea.sflag [#allocation16], %s713
          %s715 = sand.u32 %s267, 1
          %s716 = smul.addr %s715, 8
          %s717 = scalar_lea.vmem [#allocation15], %s716
          %719 = dma.done %s714, 128
        $region96: #{_ionic_currents_slab.1} parent=79 // pred_fallthru
          _
      $region80: #{_ionic_currents_slab.1} parent=5 // pred_fallthru
        _
    $region6: #{_ionic_currents_slab.1} parent=1 // loop_footer
      %s38 = sadd.s32 1, %s34
    $region7: #{_ionic_currents_slab.1} parent=1 // loop_footer_branch
      %33 = sbr.rel target = $region3
    $region8: #{_ionic_currents_slab.1} parent=1 // loop_exit
      _
    %720 = vsyncpa [#allocation4], 1
    %s721 = scalar_lea.sflag [#allocation4], 1
    %722 = vsyncpa %s721, 1
    %723 = vsyncpa [#allocation7], 1
    %s724 = scalar_lea.sflag [#allocation7], 1
    %725 = vsyncpa %s724, 1
    %726 = vsyncpa [#allocation10], 1
    %s727 = scalar_lea.sflag [#allocation10], 1
    %728 = vsyncpa %s727, 1
    %729 = vsyncpa [#allocation5], 1
    %s730 = scalar_lea.sflag [#allocation5], 1
    %731 = vsyncpa %s730, 1
    %732 = vsyncpa [#allocation13], 1
    %s733 = scalar_lea.sflag [#allocation13], 1
    %734 = vsyncpa %s733, 1
    %735 = vsyncpa [#allocation16], 1
    %s736 = scalar_lea.sflag [#allocation16], 1
    %737 = vsyncpa %s736, 1

</llo_original>
